<compile_context>
chip_gen: v7x
topology: tpu7x:2x2x1
jax: 0.10.0
libtpu: 0.0.40
codegen_flags: <defaults>
</compile_context>

<pallas_src>
import functools

import jax
import jax.numpy as jnp
from jax.experimental import pallas as pl
from jax.experimental.pallas import tpu as pltpu


def _round_up(n, m):
    return ((n + m - 1) // m) * m


def _text_encoder_kernel(x_ref, m_ref, wfc_ref, wg_ref, c_ref, o_ref,
                         *, bt, lp, d_real):
    """One grid step = one batch tile of `bt` sequences (rows = bt*lp).

    x_ref   : (bt*lp, H)   native dtype  flattened RoBERTa hidden states
    m_ref   : (bt*lp, 1)   f32           attention mask (1 = valid, 0 = pad)
    wfc_ref : (H,  Dp)     bf16          FeatureResizer.fc weight (D zero-padded)
    wg_ref  : (Dp, Dp)     bf16          GlobalTextPresentation.W_txt weight
    c_ref   : (8,  Dp)     f32           rows: 0=b_fc, 1=gamma, 2=beta, 3=b_g
                                         (pad lanes are ZERO -- pooling relies
                                          on hn/logits pad lanes being zero)
    o_ref   : (bt, Dp)     f32           pooled global text feature
    """
    dp = o_ref.shape[-1]

    b_fc = c_ref[0:1, :]
    gamma = c_ref[1:2, :]
    beta = c_ref[2:3, :]
    b_g = c_ref[3:4, :]

    # ---- FeatureResizer.fc : cast x to bf16 in-kernel, MXU matmul, f32 acc ----
    xb = x_ref[...].astype(jnp.bfloat16)
    h = jnp.dot(xb, wfc_ref[...], preferred_element_type=jnp.float32) + b_fc

    # ---- LayerNorm(eps=1e-12) over the real D lanes only.
    # Pad lanes of h are exactly 0 (zero-padded w_fc / b_fc), so lane sums over
    # Dp equal sums over the real D lanes; var = E[h^2] - mu^2.
    inv_d = jnp.float32(1.0 / d_real)
    mu = jnp.sum(h, axis=-1, keepdims=True) * inv_d
    var = jnp.sum(h * h, axis=-1, keepdims=True) * inv_d - mu * mu
    var = jnp.maximum(var, jnp.float32(0.0))
    hn = (h - mu) * jax.lax.rsqrt(var + jnp.float32(1e-12))
    # gamma/beta pad lanes are 0 => hn pad lanes are exactly 0 (pooling needs this).
    hn = hn * gamma + beta
    hn = hn.astype(jnp.bfloat16)            # single cast: feeds matmul + pooling
    # Dropout(p=0.1): identity in eval mode.

    # ---- GlobalTextPresentation logits ----
    logits = jnp.dot(hn, wg_ref[...], preferred_element_type=jnp.float32) + b_g

    # ---- Per-sequence softmax over L + weighted pooling, vectorized over bt.
    # Splitting the sublane dim (rows -> bt, lp) is a free view since lp % 8 == 0.
    logits3 = logits.reshape(bt, lp, dp)
    hn3 = hn.reshape(bt, lp, dp)
    m3 = m_ref[...].reshape(bt, lp, 1)

    wmax = jnp.max(logits3, axis=1, keepdims=True)
    # Multiplicative 0/1 mask == reference's where(mask==0, -1e9) after underflow:
    # padded tokens get exactly zero weight.
    e = jnp.exp(logits3 - wmax) * m3
    denom = jnp.maximum(jnp.sum(e, axis=1, keepdims=True), jnp.float32(1e-30))
    attn = e * pl.reciprocal(denom)          # exact reciprocal (approx=False)
    pooled = jnp.sum(hn3 * attn, axis=1)     # bf16 * f32 -> f32 accumulation
    o_ref[...] = pooled.astype(o_ref.dtype)  # single unmasked (bt, Dp) store


def text_encoder_forward(text_memory, attention_mask, params, *, b_tile=None):
    """text_memory: (B, L, H_in), attention_mask: (B, L) {0,1} int."""
    B, L, H = text_memory.shape
    D = params["w_fc"].shape[1]

    Dp = _round_up(D, 128)      # lane-dense feature dim (no-op for real D=256)
    Lp = _round_up(L, 8)        # sublane-aligned sequence dim

    # ---- batch-tile selection: ~1024 matmul rows per grid step ----
    if b_tile is not None:
        bt = int(b_tile)
    else:
        target_rows = 1024
        bt = max(1, target_rows // Lp)
        if bt >= B:
            if B > 8:
                # Whole batch would fit in one step: halve the tile so the
                # "parallel" grid axis has >= 2 steps (v7x dual TensorCore).
                bt = max(8, ((_round_up(B, 8) // 2) // 8) * 8)
            else:
                bt = B              # tiny batch (demo): single grid step
        else:
            bt = max(8, (bt // 8) * 8)
    Bp = _round_up(B, bt)
    rows = bt * Lp
    grid = (Bp // bt,)

    # ---- inputs: NO pad/cast staging copy of x in the common case ----
    if (Bp, Lp) != (B, L):
        text_memory = jnp.pad(text_memory, ((0, Bp - B), (0, Lp - L), (0, 0)))
        attention_mask = jnp.pad(attention_mask, ((0, Bp - B), (0, Lp - L)))
    x = text_memory.reshape(Bp * Lp, H)                      # free view, native dtype
    mask = attention_mask.reshape(Bp * Lp, 1).astype(jnp.float32)

    # ---- weights: pad D to lane width (zero pad is exact), pack constants ----
    pd = Dp - D
    w_fc = jnp.pad(params["w_fc"], ((0, 0), (0, pd))).astype(jnp.bfloat16)   # (H, Dp)
    w_g = jnp.pad(params["w_g"], ((0, pd), (0, pd))).astype(jnp.bfloat16)    # (Dp, Dp)
    # NOTE: gamma/beta/b_g pad lanes MUST remain zero so hn/logits pad lanes
    # are exactly zero (the pooled sum over lanes relies on it).
    consts = jnp.zeros((8, Dp), jnp.float32)
    consts = consts.at[0, :D].set(params["b_fc"].reshape(D))
    consts = consts.at[1, :D].set(params["ln_gamma"].reshape(D))
    consts = consts.at[2, :D].set(params["ln_beta"].reshape(D))
    consts = consts.at[3, :D].set(params["b_g"].reshape(D))

    kernel = functools.partial(_text_encoder_kernel, bt=bt, lp=Lp, d_real=D)

    out = pl.pallas_call(
        kernel,
        grid=grid,
        in_specs=[
            pl.BlockSpec((rows, H), lambda i: (i, 0)),       # x (flattened rows)
            pl.BlockSpec((rows, 1), lambda i: (i, 0)),       # 0/1 mask
            pl.BlockSpec((H, Dp), lambda i: (0, 0)),         # w_fc
            pl.BlockSpec((Dp, Dp), lambda i: (0, 0)),        # w_g
            pl.BlockSpec((8, Dp), lambda i: (0, 0)),         # packed constants
        ],
        out_specs=pl.BlockSpec((bt, Dp), lambda i: (i, 0)),
        out_shape=jax.ShapeDtypeStruct((Bp, Dp), jnp.float32),
        compiler_params=pltpu.CompilerParams(
            dimension_semantics=("parallel",),
            # <= ~48 MiB: headroom on v7x (64 MiB physical), above the scoped
            # defaults on v5e/v6e; plenty for rows~1024 double-buffered blocks.
            vmem_limit_bytes=48 * 1024 * 1024,
        ),
    )(x, mask, w_fc, w_g, consts)

    # Strip padding; match the module's (B, 1, D) output.
    return out[:B, :D].reshape(B, 1, D)


def _reference_forward(text_memory, attention_mask, params):
    """Plain-JAX f32 reference mirroring the PyTorch semantics (eval mode)."""
    h = jnp.einsum("blh,hd->bld", text_memory, params["w_fc"]) + params["b_fc"]
    mu = jnp.mean(h, axis=-1, keepdims=True)
    var = jnp.mean((h - mu) ** 2, axis=-1, keepdims=True)
    hn = (h - mu) / jnp.sqrt(var + 1e-12)
    hn = hn * params["ln_gamma"] + params["ln_beta"]
    w = jnp.einsum("bld,de->ble", hn, params["w_g"]) + params["b_g"]
    m = attention_mask.astype(jnp.float32)[..., None]
    w = jnp.where(m == 0.0, -1e9, w)
    attn = jax.nn.softmax(w, axis=1)
    return jnp.sum(hn * attn, axis=1, keepdims=True)


if __name__ == "__main__":
    B, L = 2, 8          # batch, tokenized sequence length
    H_IN = 32            # stand-in for RoBERTa hidden_size
    D = 32               # cfg.hidden_dim

    key = jax.random.PRNGKey(0)
    k_x, k_wfc, k_bfc, k_wg, k_bg = jax.random.split(key, 5)

    # Synthetic RoBERTa last_hidden_state + attention mask (with padding).
    text_memory = jax.random.normal(k_x, (B, L, H_IN), dtype=jnp.float32)
    attention_mask = jnp.array(
        [[1, 1, 1, 1, 1, 1, 0, 0],
         [1, 1, 1, 1, 0, 0, 0, 0]], dtype=jnp.int32)

    params = {
        "w_fc":     0.1 * jax.random.normal(k_wfc, (H_IN, D), dtype=jnp.float32),
        "b_fc":     0.01 * jax.random.normal(k_bfc, (1, D), dtype=jnp.float32),
        "ln_gamma": jnp.ones((1, D), dtype=jnp.float32),
        "ln_beta":  jnp.zeros((1, D), dtype=jnp.float32),
        "w_g":      0.1 * jax.random.normal(k_wg, (D, D), dtype=jnp.float32),
        "b_g":      0.01 * jax.random.normal(k_bg, (1, D), dtype=jnp.float32),
    }

    out = text_encoder_forward(text_memory, attention_mask, params)
    out = jax.block_until_ready(out)

    ref = _reference_forward(text_memory, attention_mask, params)
    assert out.shape == (B, 1, D), out.shape
    err = float(jnp.max(jnp.abs(out - ref)))
    # bf16 matmuls / bf16 hn (f32 accumulation) => looser tolerance than pure
    # f32; LayerNorm statistics and softmax stay in f32.
    assert err < 5e-2, f"mismatch vs reference: {err}"

    print("KERNEL_OK")
</pallas_src>

<mosaic_0001>
module attributes {stable_mosaic.version = 11 : i64} {
  func.func @_text_encoder_kernel(%arg0: i32, %arg1: memref<16x32xf32, #tpu.memory_space<vmem>>, %arg2: memref<16x1xf32, #tpu.memory_space<vmem>>, %arg3: memref<32x128xbf16, #tpu.memory_space<vmem>>, %arg4: memref<128x128xbf16, #tpu.memory_space<vmem>>, %arg5: memref<8x128xf32, #tpu.memory_space<vmem>>, %arg6: memref<2x128xf32, #tpu.memory_space<vmem>>) attributes {dimension_semantics = [#tpu.dimension_semantics<parallel>], iteration_bounds = array<i64: 1>, scalar_prefetch = 0 : i64, scratch_operands = 0 : i64, tpu.core_type = #tpu.core_type<tc>, window_params = [{transform_indices = @transform_0, window_bounds = array<i64: 16, 32>}, {transform_indices = @transform_1, window_bounds = array<i64: 16, 1>}, {pipeline_mode = #tpu.pipeline_mode<synchronous>, transform_indices = @transform_2, window_bounds = array<i64: 32, 128>}, {pipeline_mode = #tpu.pipeline_mode<synchronous>, transform_indices = @transform_3, window_bounds = array<i64: 128, 128>}, {pipeline_mode = #tpu.pipeline_mode<synchronous>, transform_indices = @transform_4, window_bounds = array<i64: 8, 128>}, {transform_indices = @transform_5, window_bounds = array<i64: 2, 128>}]} {
    %c0 = arith.constant 0 : index
    %c0_0 = arith.constant 0 : index
    %0 = vector.load %arg5[%c0, %c0_0] : memref<8x128xf32, #tpu.memory_space<vmem>>, vector<1x128xf32>
    %c1 = arith.constant 1 : index
    %c0_1 = arith.constant 0 : index
    %1 = vector.load %arg5[%c1, %c0_1] : memref<8x128xf32, #tpu.memory_space<vmem>>, vector<1x128xf32>
    %c2 = arith.constant 2 : index
    %c0_2 = arith.constant 0 : index
    %2 = vector.load %arg5[%c2, %c0_2] : memref<8x128xf32, #tpu.memory_space<vmem>>, vector<1x128xf32>
    %c3 = arith.constant 3 : index
    %c0_3 = arith.constant 0 : index
    %3 = vector.load %arg5[%c3, %c0_3] : memref<8x128xf32, #tpu.memory_space<vmem>>, vector<1x128xf32>
    %c0_4 = arith.constant 0 : index
    %c0_5 = arith.constant 0 : index
    %4 = vector.load %arg1[%c0_4, %c0_5] : memref<16x32xf32, #tpu.memory_space<vmem>>, vector<16x32xf32>
    %5 = arith.truncf %4 : vector<16x32xf32> to vector<16x32xbf16>
    %c0_6 = arith.constant 0 : index
    %c0_7 = arith.constant 0 : index
    %6 = vector.load %arg3[%c0_6, %c0_7] : memref<32x128xbf16, #tpu.memory_space<vmem>>, vector<32x128xbf16>
    %cst = arith.constant dense<0.000000e+00> : vector<16x128xf32>
    %7 = tpu.matmul %5, %6, %cst {dimension_numbers = #tpu.dot_dimension_numbers<[1], [0], [0], [1], [0, 0, 1, 1], [], []>} : vector<16x32xbf16>, vector<32x128xbf16>, vector<16x128xf32> -> vector<16x128xf32>
    %8 = vector.broadcast %0 : vector<1x128xf32> to vector<16x128xf32>
    %9 = arith.addf %7, %8 : vector<16x128xf32>
    %cst_8 = arith.constant dense<0.000000e+00> : vector<16xf32>
    %10 = vector.multi_reduction <add>, %9, %cst_8 [1] : vector<16x128xf32> to vector<16xf32>
    %11 = vector.shape_cast %10 : vector<16xf32> to vector<16x1xf32>
    %cst_9 = arith.constant 3.125000e-02 : f32
    %12 = vector.broadcast %cst_9 : f32 to vector<16x1xf32>
    %13 = arith.mulf %11, %12 : vector<16x1xf32>
    %14 = arith.mulf %9, %9 : vector<16x128xf32>
    %cst_10 = arith.constant dense<0.000000e+00> : vector<16xf32>
    %15 = vector.multi_reduction <add>, %14, %cst_10 [1] : vector<16x128xf32> to vector<16xf32>
    %16 = vector.shape_cast %15 : vector<16xf32> to vector<16x1xf32>
    %cst_11 = arith.constant 3.125000e-02 : f32
    %17 = vector.broadcast %cst_11 : f32 to vector<16x1xf32>
    %18 = arith.mulf %16, %17 : vector<16x1xf32>
    %19 = arith.mulf %13, %13 : vector<16x1xf32>
    %20 = arith.subf %18, %19 : vector<16x1xf32>
    %cst_12 = arith.constant 0.000000e+00 : f32
    %21 = vector.broadcast %cst_12 : f32 to vector<16x1xf32>
    %22 = arith.maximumf %20, %21 : vector<16x1xf32>
    %23 = vector.broadcast %13 : vector<16x1xf32> to vector<16x128xf32>
    %24 = arith.subf %9, %23 : vector<16x128xf32>
    %cst_13 = arith.constant 9.99999996E-13 : f32
    %25 = vector.broadcast %cst_13 : f32 to vector<16x1xf32>
    %26 = arith.addf %22, %25 : vector<16x1xf32>
    %27 = math.rsqrt %26 : vector<16x1xf32>
    %28 = vector.broadcast %27 : vector<16x1xf32> to vector<16x128xf32>
    %29 = arith.mulf %24, %28 : vector<16x128xf32>
    %30 = vector.broadcast %1 : vector<1x128xf32> to vector<16x128xf32>
    %31 = arith.mulf %29, %30 : vector<16x128xf32>
    %32 = vector.broadcast %2 : vector<1x128xf32> to vector<16x128xf32>
    %33 = arith.addf %31, %32 : vector<16x128xf32>
    %34 = arith.truncf %33 : vector<16x128xf32> to vector<16x128xbf16>
    %c0_14 = arith.constant 0 : index
    %c0_15 = arith.constant 0 : index
    %35 = vector.load %arg4[%c0_14, %c0_15] : memref<128x128xbf16, #tpu.memory_space<vmem>>, vector<128x128xbf16>
    %cst_16 = arith.constant dense<0.000000e+00> : vector<16x128xf32>
    %36 = tpu.matmul %34, %35, %cst_16 {dimension_numbers = #tpu.dot_dimension_numbers<[1], [0], [0], [1], [0, 0, 1, 1], [], []>} : vector<16x128xbf16>, vector<128x128xbf16>, vector<16x128xf32> -> vector<16x128xf32>
    %37 = vector.broadcast %3 : vector<1x128xf32> to vector<16x128xf32>
    %38 = arith.addf %36, %37 : vector<16x128xf32>
    %39 = vector.shape_cast %38 : vector<16x128xf32> to vector<2x8x128xf32>
    %40 = vector.shape_cast %34 : vector<16x128xbf16> to vector<2x8x128xbf16>
    %c0_17 = arith.constant 0 : index
    %c0_18 = arith.constant 0 : index
    %41 = vector.load %arg2[%c0_17, %c0_18] : memref<16x1xf32, #tpu.memory_space<vmem>>, vector<16x1xf32>
    %42 = vector.shape_cast %41 : vector<16x1xf32> to vector<2x8x1xf32>
    %cst_19 = arith.constant dense<0xFF800000> : vector<2x128xf32>
    %43 = vector.multi_reduction <maximumf>, %39, %cst_19 [1] : vector<2x8x128xf32> to vector<2x128xf32>
    %44 = vector.shape_cast %43 : vector<2x128xf32> to vector<2x1x128xf32>
    %45 = vector.broadcast %44 : vector<2x1x128xf32> to vector<2x8x128xf32>
    %46 = arith.subf %39, %45 : vector<2x8x128xf32>
    %47 = math.exp %46 : vector<2x8x128xf32>
    %48 = vector.broadcast %42 : vector<2x8x1xf32> to vector<2x8x128xf32>
    %49 = arith.mulf %47, %48 : vector<2x8x128xf32>
    %cst_20 = arith.constant dense<0.000000e+00> : vector<2x128xf32>
    %50 = vector.multi_reduction <add>, %49, %cst_20 [1] : vector<2x8x128xf32> to vector<2x128xf32>
    %51 = vector.shape_cast %50 : vector<2x128xf32> to vector<2x1x128xf32>
    %cst_21 = arith.constant 1.000000e-30 : f32
    %52 = vector.broadcast %cst_21 : f32 to vector<2x1x128xf32>
    %53 = arith.maximumf %51, %52 : vector<2x1x128xf32>
    %54 = tpu.reciprocal %53 : vector<2x1x128xf32> -> vector<2x1x128xf32>
    %55 = vector.broadcast %54 : vector<2x1x128xf32> to vector<2x8x128xf32>
    %56 = arith.mulf %49, %55 : vector<2x8x128xf32>
    %57 = arith.extf %40 : vector<2x8x128xbf16> to vector<2x8x128xf32>
    %58 = arith.mulf %57, %56 : vector<2x8x128xf32>
    %cst_22 = arith.constant dense<0.000000e+00> : vector<2x128xf32>
    %59 = vector.multi_reduction <add>, %58, %cst_22 [1] : vector<2x8x128xf32> to vector<2x128xf32>
    %c0_23 = arith.constant 0 : index
    %c0_24 = arith.constant 0 : index
    %60 = vector.load %arg6[%c0_23, %c0_24] : memref<2x128xf32, #tpu.memory_space<vmem>>, vector<2x128xf32>
    tpu.vector_store %arg6[%c0_23, %c0_24], %59 {strides = array<i32>} : memref<2x128xf32, #tpu.memory_space<vmem>>, vector<2x128xf32>,
    return
  }
  func.func @transform_0(%arg0: i32) -> (i32, i32) {
    %c0_i32 = arith.constant 0 : i32
    %c0_i32_0 = arith.constant 0 : i32
    return %arg0, %c0_i32 : i32, i32
  }
  func.func @transform_1(%arg0: i32) -> (i32, i32) {
    %c0_i32 = arith.constant 0 : i32
    %c0_i32_0 = arith.constant 0 : i32
    return %arg0, %c0_i32 : i32, i32
  }
  func.func @transform_2(%arg0: i32) -> (i32, i32) {
    %c0_i32 = arith.constant 0 : i32
    %c0_i32_0 = arith.constant 0 : i32
    %c0_i32_1 = arith.constant 0 : i32
    return %c0_i32, %c0_i32_0 : i32, i32
  }
  func.func @transform_3(%arg0: i32) -> (i32, i32) {
    %c0_i32 = arith.constant 0 : i32
    %c0_i32_0 = arith.constant 0 : i32
    %c0_i32_1 = arith.constant 0 : i32
    return %c0_i32, %c0_i32_0 : i32, i32
  }
  func.func @transform_4(%arg0: i32) -> (i32, i32) {
    %c0_i32 = arith.constant 0 : i32
    %c0_i32_0 = arith.constant 0 : i32
    %c0_i32_1 = arith.constant 0 : i32
    return %c0_i32, %c0_i32_0 : i32, i32
  }
  func.func @transform_5(%arg0: i32) -> (i32, i32) {
    %c0_i32 = arith.constant 0 : i32
    %c0_i32_0 = arith.constant 0 : i32
    return %arg0, %c0_i32 : i32, i32
  }
}

</mosaic_0001>

<llo_original>
// kernel: tpu_custom_call.1
$region0: #{tpu_custom_call.1}
  #allocation0 [shape = 'u32[]', space=smem, size = 0x4, offset = 0x4, fixed_abs, tag = 'smem constant byte address 0x4 - core index']
  #allocation1 [shape = 'u32[144,128]{1,0:T(1,128)}', space=vmem, size = 0x12000, scoped, tag = 'internal scratch']
  %s0 = inlined_call_operand.vmem [shape: f32[16,32], index: 0, kind: input, shape index: {}]
  %s1 = inlined_call_operand.vmem [shape: f32[16,1], index: 1, kind: input, shape index: {}]
  %s2 = inlined_call_operand.hbm [shape: bf16[32,128], index: 2, kind: input, shape index: {}]
  %s3 = inlined_call_operand.hbm [shape: bf16[128,128], index: 3, kind: input, shape index: {}]
  %s4 = inlined_call_operand.vmem [shape: f32[8,128], index: 4, kind: input, shape index: {}]
  %s5 = inlined_call_operand.hbm [shape: f32[2,128], index: 5, kind: output, shape index: {}]
  %s6 = sld [smem:[#allocation0]]
  $region38: #{tpu_custom_call.1} parent=0
    _
  %s8 = ssub.s32 1, %s6
  %s9 = scalar_select 0, %s8, %s6
  $region1: #{tpu_custom_call.1} parent=0
    #allocation2 [shape = 'u8[8192]{0}', space=vmem, size = 0x2000, scoped, tag = 'input window, operand 2, single buffered']
    #allocation3 [shape = 's32[1]{0}', space=sflag, size = 0x4, scoped, tag = 'scoped memory for tpu_custom_call.1']
    #allocation4 [shape = 's32[1]{0}', space=sflag, size = 0x4, scoped, tag = 'scoped memory for tpu_custom_call.1']
    #allocation5 [shape = 'u8[32768]{0}', space=vmem, size = 0x8000, scoped, tag = 'input window, operand 3, single buffered']
    #allocation6 [shape = 's32[1]{0}', space=sflag, size = 0x4, scoped, tag = 'scoped memory for tpu_custom_call.1']
    #allocation7 [shape = 'u8[1024]{0}', space=vmem, size = 0x400, scoped, tag = 'output window, operand 0, single buffered']
    %10 = vsyncpa [#allocation3], 0
    %11 = vsyncpa [#allocation6], 0
    %12 = vsyncpa [#allocation4], 0
    // Predicated region
    $region2: #{tpu_custom_call.1} parent=1 // pred_check
      _
    $region3: #{tpu_custom_call.1} parent=1 // pred_check_branch
      %14 = sbr.rel (0) target = $region5
    $region4: #{tpu_custom_call.1} parent=1 // pred_region
      _
    $region5: #{tpu_custom_call.1} parent=1 // pred_fallthru
      _
    // Predicated region
    $region6: #{tpu_custom_call.1} parent=1 // pred_check
      _
    $region7: #{tpu_custom_call.1} parent=1 // pred_check_branch
      %16 = sbr.rel (0) target = $region9
    $region8: #{tpu_custom_call.1} parent=1 // pred_region
      _
    $region9: #{tpu_custom_call.1} parent=1 // pred_fallthru
      _
    // Predicated region
    $region10: #{tpu_custom_call.1} parent=1 // pred_check
      _
    $region11: #{tpu_custom_call.1} parent=1 // pred_check_branch
      %18 = sbr.rel (0) target = $region13
    $region12: #{tpu_custom_call.1} parent=1 // pred_region
      %s20 = ssub.s32 256, 256
      %21 = vsyncadd [#allocation3], %s20
      %s22 = sshll.u32 [#allocation2], 4
      %s23 = int_to_ptr.vmem [resolvable:$true] %s22
      %28 = dma.hbm_to_vmem [thread:$0]  %s2, 256, %s23, [#allocation3], 64, 64, 4
    $region13: #{tpu_custom_call.1} parent=1 // pred_fallthru
      _
    // Predicated region
    $region14: #{tpu_custom_call.1} parent=1 // pred_check
      _
    $region15: #{tpu_custom_call.1} parent=1 // pred_check_branch
      %30 = sbr.rel (0) target = $region17
    $region16: #{tpu_custom_call.1} parent=1 // pred_region
      %s32 = ssub.s32 1024, 1024
      %33 = vsyncadd [#allocation6], %s32
      %s34 = sshll.u32 [#allocation5], 4
      %s35 = int_to_ptr.vmem [resolvable:$true] %s34
      %40 = dma.hbm_to_vmem [thread:$0]  %s3, 1024, %s35, [#allocation6], 64, 64, 4
    $region17: #{tpu_custom_call.1} parent=1 // pred_fallthru
      _
    // Predicated region
    $region18: #{tpu_custom_call.1} parent=1 // pred_check
      _
    $region19: #{tpu_custom_call.1} parent=1 // pred_check_branch
      %42 = sbr.rel (0) target = $region21
    $region20: #{tpu_custom_call.1} parent=1 // pred_region
      _
    $region21: #{tpu_custom_call.1} parent=1 // pred_fallthru
      _
    // Predicated region
    $region22: #{tpu_custom_call.1} parent=1 // pred_check
      _
    $region23: #{tpu_custom_call.1} parent=1 // pred_check_branch
      %44 = sbr.rel (0) target = $region25
    $region24: #{tpu_custom_call.1} parent=1 // pred_region
      %45 = dma.done [#allocation3], 256
    $region25: #{tpu_custom_call.1} parent=1 // pred_fallthru
      _
    // Predicated region
    $region26: #{tpu_custom_call.1} parent=1 // pred_check
      _
    $region27: #{tpu_custom_call.1} parent=1 // pred_check_branch
      %47 = sbr.rel (0) target = $region29
    $region28: #{tpu_custom_call.1} parent=1 // pred_region
      %48 = dma.done [#allocation6], 1024
    $region29: #{tpu_custom_call.1} parent=1 // pred_fallthru
      _
    %v50 = vld [vmem:[%s4] sm:$0x1]
    %v51 = vld [vmem:[%s4 + $0x1] sm:$0x1]
    %v52 = vld [vmem:[%s4 + $0x2] sm:$0x1]
    %v53 = vld [vmem:[%s4 + $0x3] sm:$0x1]
    %v54 = vld [vmem:[%s0] sm:$0xff]
    %v55 = vld [vmem:[%s0 + $0x8] sm:$0xff]
    %v56 = vpack.c.bf16 %v55, %v54
    %v57 = vld [vmem:[#allocation2] sm:$0xf]
    %v58 = vld [vmem:[#allocation2 + $0x4] sm:$0xf]
    %v59 = vld [vmem:[#allocation2 + $0x8] sm:$0xf]
    %v60 = vld [vmem:[#allocation2 + $0xc] sm:$0xf]
    %v61 = vlaneseq
    %v62 = vshrl.u32 %v61, 7
    %v63 = vsub.s32 0, %v62
    %v64 = vrot.slane %v50, %v63
    %v69 = vunpack.c.l.b16 %v57
    %v70 = vunpack.c.l.b16 %v58
    %v71 = vunpack.c.l.b16 %v59
    %v72 = vunpack.c.l.b16 %v60
    %v73 = vpack.c.b16 %v70, %v69
    %v74 = vpack.c.b16 %v72, %v71
    %vm77 = vcmask 261120
    %v79 = vsel %vm77, %v56, 0
    %81 = vmatprep.subr.bf16.mxu0 0
    %82 = vmatpush1.bf16.msra.mxu0 %v73
    %83 = vmatprep.subr.bf16.mxu0 0
    %84 = vmatpush1.bf16.msra.mxu0 %v74
    %85 = vmatprep.subr.bf16.mxu0 0
    %86 = vmatpush1.bf16.msra.mxu0 0
    %87 = vmatprep.subr.bf16.mxu0 0
    %88 = vmatpush1.bf16.msra.mxu0 0
    %89 = vmatprep.subr.bf16.mxu0 0
    %90 = vmatpush1.bf16.msra.mxu0 0
    %91 = vmatprep.subr.bf16.mxu0 0
    %92 = vmatpush1.bf16.msra.mxu0 0
    %93 = vmatprep.subr.bf16.mxu0 0
    %94 = vmatpush1.bf16.msra.mxu0 0
    %95 = vmatprep.subr.bf16.mxu0 0
    %96 = vmatpush1.bf16.msra.mxu0 0
    %97 = vmatprep.subr.bf16.mxu0 0
    %98 = vmatpush1.bf16.msra.mxu0 0
    %99 = vmatprep.subr.bf16.mxu0 0
    %100 = vmatpush1.bf16.msra.mxu0 0
    %101 = vmatprep.subr.bf16.mxu0 0
    %102 = vmatpush1.bf16.msra.mxu0 0
    %103 = vmatprep.subr.bf16.mxu0 0
    %104 = vmatpush1.bf16.msra.mxu0 0
    %105 = vmatprep.subr.bf16.mxu0 0
    %106 = vmatpush1.bf16.msra.mxu0 0
    %107 = vmatprep.subr.bf16.mxu0 0
    %108 = vmatpush1.bf16.msra.mxu0 0
    %109 = vmatprep.subr.bf16.mxu0 0
    %110 = vmatpush1.bf16.msra.mxu0 0
    %111 = vmatprep.subr.bf16.mxu0 0
    %112 = vmatpush1.bf16.msra.mxu0 0
    %113 = vmatprep.mubr.bf16.mxu0 0
    %114 = vmatmul.mubr.bf16.gmra.mrb[0].mxu0 %v79
    %v115 = vpop.f32.mrb[0].mxu0
    %v116 = vadd.f32 %v64, %v115
    %v117 = vpop.f32.mrb[0].mxu0
    %v118 = vpop.f32.mrb[0].mxu0
    %v119 = vadd.f32 %v64, %v118
    %v120 = vpop.f32.mrb[0].mxu0
    %121 = vdwg.mxu0
    %122 = vadd.xlane.f32.xlu0 %v116
    %v123 = vpop.xlane.xlu0 %122
    %124 = vadd.xlane.f32.xlu0 %v119
    %v125 = vpop.xlane.xlu0 %124
    %v126 = vmul.f32 %v123, 0.03125
    %v127 = vmul.f32 %v125, 0.03125
    %v128 = vmul.f32 %v116, %v116
    %v129 = vmul.f32 %v119, %v119
    %130 = vadd.xlane.f32.xlu0 %v128
    %v131 = vpop.xlane.xlu0 %130
    %132 = vadd.xlane.f32.xlu0 %v129
    %v133 = vpop.xlane.xlu0 %132
    %v134 = vmul.f32 %v131, 0.03125
    %v135 = vmul.f32 %v133, 0.03125
    %v136 = vmul.f32 %v126, %v126
    %v137 = vmul.f32 %v127, %v127
    %v138 = vsub.f32 %v134, %v136
    %v139 = vsub.f32 %v135, %v137
    %v140 = vmax.f32 %v138, 0.0
    %v141 = vmax.f32 %v139, 0.0
    %v142 = vsub.f32 %v116, %v126
    %v143 = vsub.f32 %v119, %v127
    %v144 = vadd.f32 %v140, 1e-12
    %v145 = vadd.f32 %v141, 1e-12
    %v146 = vrsqrt.pop %v144
    %v147 = vrsqrt.pop %v145
    %v148 = vmul.f32 %v142, %v146
    %v149 = vmul.f32 %v143, %v147
    %v150 = vlaneseq
    %v151 = vshrl.u32 %v150, 7
    %v152 = vsub.s32 0, %v151
    %v153 = vrot.slane %v51, %v152
    %v154 = vmul.f32 %v148, %v153
    %v155 = vmul.f32 %v149, %v153
    %v156 = vlaneseq
    %v157 = vshrl.u32 %v156, 7
    %v158 = vsub.s32 0, %v157
    %v159 = vrot.slane %v52, %v158
    %v160 = vadd.f32 %v154, %v159
    %v161 = vadd.f32 %v155, %v159
    %v162 = vpack.c.bf16 %v161, %v160
    %v163 = vld [vmem:[#allocation5] sm:$0xf]
    %v164 = vld [vmem:[#allocation5 + $0x4] sm:$0xf]
    %v165 = vld [vmem:[#allocation5 + $0x8] sm:$0xf]
    %v166 = vld [vmem:[#allocation5 + $0xc] sm:$0xf]
    %v167 = vld [vmem:[#allocation5 + $0x10] sm:$0xf]
    %v168 = vld [vmem:[#allocation5 + $0x14] sm:$0xf]
    %v169 = vld [vmem:[#allocation5 + $0x18] sm:$0xf]
    %v170 = vld [vmem:[#allocation5 + $0x1c] sm:$0xf]
    %v171 = vld [vmem:[#allocation5 + $0x20] sm:$0xf]
    %v172 = vld [vmem:[#allocation5 + $0x24] sm:$0xf]
    %v173 = vld [vmem:[#allocation5 + $0x28] sm:$0xf]
    %v174 = vld [vmem:[#allocation5 + $0x2c] sm:$0xf]
    %v175 = vld [vmem:[#allocation5 + $0x30] sm:$0xf]
    %v176 = vld [vmem:[#allocation5 + $0x34] sm:$0xf]
    %v177 = vld [vmem:[#allocation5 + $0x38] sm:$0xf]
    %v178 = vld [vmem:[#allocation5 + $0x3c] sm:$0xf]
    %v179 = vlaneseq
    %v180 = vshrl.u32 %v179, 7
    %v181 = vsub.s32 0, %v180
    %v182 = vrot.slane %v53, %v181
    %v199 = vunpack.c.l.b16 %v163
    %v200 = vunpack.c.l.b16 %v164
    %v201 = vunpack.c.l.b16 %v165
    %v202 = vunpack.c.l.b16 %v166
    %v203 = vunpack.c.l.b16 %v167
    %v204 = vunpack.c.l.b16 %v168
    %v205 = vunpack.c.l.b16 %v169
    %v206 = vunpack.c.l.b16 %v170
    %v207 = vunpack.c.l.b16 %v171
    %v208 = vunpack.c.l.b16 %v172
    %v209 = vunpack.c.l.b16 %v173
    %v210 = vunpack.c.l.b16 %v174
    %v211 = vunpack.c.l.b16 %v175
    %v212 = vunpack.c.l.b16 %v176
    %v213 = vunpack.c.l.b16 %v177
    %v214 = vunpack.c.l.b16 %v178
    %v215 = vpack.c.b16 %v200, %v199
    %v216 = vpack.c.b16 %v202, %v201
    %v217 = vpack.c.b16 %v204, %v203
    %v218 = vpack.c.b16 %v206, %v205
    %v219 = vpack.c.b16 %v208, %v207
    %v220 = vpack.c.b16 %v210, %v209
    %v221 = vpack.c.b16 %v212, %v211
    %v222 = vpack.c.b16 %v214, %v213
    %231 = vmatprep.subr.bf16.mxu0 0
    %232 = vmatpush1.bf16.msra.mxu0 %v215
    %233 = vmatprep.subr.bf16.mxu0 0
    %234 = vmatpush1.bf16.msra.mxu0 %v216
    %235 = vmatprep.subr.bf16.mxu0 0
    %236 = vmatpush1.bf16.msra.mxu0 %v217
    %237 = vmatprep.subr.bf16.mxu0 0
    %238 = vmatpush1.bf16.msra.mxu0 %v218
    %239 = vmatprep.subr.bf16.mxu0 0
    %240 = vmatpush1.bf16.msra.mxu0 %v219
    %241 = vmatprep.subr.bf16.mxu0 0
    %242 = vmatpush1.bf16.msra.mxu0 %v220
    %243 = vmatprep.subr.bf16.mxu0 0
    %244 = vmatpush1.bf16.msra.mxu0 %v221
    %245 = vmatprep.subr.bf16.mxu0 0
    %246 = vmatpush1.bf16.msra.mxu0 %v222
    %247 = vmatprep.subr.bf16.mxu0 0
    %248 = vmatpush1.bf16.msra.mxu0 0
    %249 = vmatprep.subr.bf16.mxu0 0
    %250 = vmatpush1.bf16.msra.mxu0 0
    %251 = vmatprep.subr.bf16.mxu0 0
    %252 = vmatpush1.bf16.msra.mxu0 0
    %253 = vmatprep.subr.bf16.mxu0 0
    %254 = vmatpush1.bf16.msra.mxu0 0
    %255 = vmatprep.subr.bf16.mxu0 0
    %256 = vmatpush1.bf16.msra.mxu0 0
    %257 = vmatprep.subr.bf16.mxu0 0
    %258 = vmatpush1.bf16.msra.mxu0 0
    %259 = vmatprep.subr.bf16.mxu0 0
    %260 = vmatpush1.bf16.msra.mxu0 0
    %261 = vmatprep.subr.bf16.mxu0 0
    %262 = vmatpush1.bf16.msra.mxu0 0
    %263 = vmatprep.mubr.bf16.mxu0 0
    %264 = vmatmul.mubr.bf16.gmra.mrb[0].mxu0 %v162
    %v265 = vpop.f32.mrb[0].mxu0
    %v266 = vadd.f32 %v182, %v265
    %v267 = vpop.f32.mrb[0].mxu0
    %v268 = vpop.f32.mrb[0].mxu0
    %v269 = vadd.f32 %v182, %v268
    %v270 = vpop.f32.mrb[0].mxu0
    %271 = vdwg.mxu0
    %v273 = vunpack.c.l.b16 %v162
    %v274 = vunpack.c.h.b16 %v162
    %v275 = vpack.c.b16 %v273, %v273
    %v276 = vpack.c.b16 %v274, %v274
    %v279 = vld [vmem:[%s1] sm:$0xff]
    %v280 = vld [vmem:[%s1 + $0x8] sm:$0xff]
    %v281 = vrot.slane %v266, 4
    %v282 = vmax.f32 %v266, %v281
    %v283 = vrot.slane %v282, 2
    %v284 = vmax.f32 %v282, %v283
    %v285 = vrot.slane %v284, 1
    %v286 = vmax.f32 %v284, %v285
    %v287 = vrot.slane %v269, 4
    %v288 = vmax.f32 %v269, %v287
    %v289 = vrot.slane %v288, 2
    %v290 = vmax.f32 %v288, %v289
    %v291 = vrot.slane %v290, 1
    %v292 = vmax.f32 %v290, %v291
    %v293 = vsub.f32 %v266, %v286
    %v294 = vsub.f32 %v269, %v292
    %v295 = vmul.f32 %v293, 1.442695
    %v296 = vpow.pop %v295
    %v297 = vmul.f32 %v294, 1.442695
    %v298 = vpow.pop %v297
    %300 = vset.pattern.permute.xlu0 0
    %301 = vperm.xlu0 %300, %v279
    %v302 = vpop.permute.xlu0 %301
    %305 = vset.pattern.permute.xlu0 0
    %306 = vperm.xlu0 %305, %v280
    %v307 = vpop.permute.xlu0 %306
    %v309 = vmul.f32 %v296, %v302
    %v310 = vmul.f32 %v298, %v307
    %v311 = vrot.slane %v309, 4
    %v312 = vadd.f32 %v309, %v311
    %v313 = vrot.slane %v312, 2
    %v314 = vadd.f32 %v312, %v313
    %v315 = vrot.slane %v314, 1
    %v316 = vadd.f32 %v314, %v315
    %v317 = vrot.slane %v310, 4
    %v318 = vadd.f32 %v310, %v317
    %v319 = vrot.slane %v318, 2
    %v320 = vadd.f32 %v318, %v319
    %v321 = vrot.slane %v320, 1
    %v322 = vadd.f32 %v320, %v321
    %v323 = vmax.f32 %v316, 1e-30
    %v324 = vmax.f32 %v322, 1e-30
    %v325 = vrcp.pop %v323
    %v326 = vrcp.pop %v324
    %v327 = vmul.f32 %v309, %v325
    %v328 = vmul.f32 %v310, %v326
    %v329 = vunpack.c.l.bf16 %v275
    %v330 = vunpack.c.l.bf16 %v276
    %v331 = vmul.f32 %v329, %v327
    %v332 = vmul.f32 %v330, %v328
    %v333 = vrot.slane %v331, 4
    %v334 = vadd.f32 %v331, %v333
    %v335 = vrot.slane %v334, 2
    %v336 = vadd.f32 %v334, %v335
    %v337 = vrot.slane %v336, 1
    %v338 = vadd.f32 %v336, %v337
    %v339 = vrot.slane %v332, 4
    %v340 = vadd.f32 %v332, %v339
    %v341 = vrot.slane %v340, 2
    %v342 = vadd.f32 %v340, %v341
    %v343 = vrot.slane %v342, 1
    %v344 = vadd.f32 %v342, %v343
    %vm347 = vcmask 1041409
    %v348 = vsel %vm347, %v344, %v338
    %350 = vst [vmem:[#allocation7] sm:$0x3] %v348
    // Predicated region
    $region30: #{tpu_custom_call.1} parent=1 // pred_check
      _
    $region31: #{tpu_custom_call.1} parent=1 // pred_check_branch
      %352 = sbr.rel (0) target = $region33
    $region32: #{tpu_custom_call.1} parent=1 // pred_region
      %s354 = ssub.s32 32, 32
      %355 = vsyncadd [#allocation4], %s354
      %s357 = sshll.u32 [#allocation7], 4
      %s358 = int_to_ptr.vmem [resolvable:$true] %s357
      %360 = dma.vmem_to_hbm [thread:$0]  %s358, 32, %s5, [#allocation4]
    $region33: #{tpu_custom_call.1} parent=1 // pred_fallthru
      _
    // Predicated region
    $region34: #{tpu_custom_call.1} parent=1 // pred_check
      _
    $region35: #{tpu_custom_call.1} parent=1 // pred_check_branch
      %362 = sbr.rel (0) target = $region37
    $region36: #{tpu_custom_call.1} parent=1 // pred_region
      %363 = dma.done [#allocation4], 32
    $region37: #{tpu_custom_call.1} parent=1 // pred_fallthru
      _
    %364 = vsyncpa [#allocation3], 1
    %365 = vsyncpa [#allocation6], 1
    %366 = vsyncpa [#allocation4], 1

</llo_original>
